<compile_context>
chip_gen: v5e
topology: v5e:2x2
jax: 0.10.0
libtpu: 0.0.40
codegen_flags: <defaults>
</compile_context>

<pallas_src>
import functools

import numpy as np
import jax
import jax.numpy as jnp
from jax.experimental import pallas as pl
from jax.experimental.pallas import tpu as pltpu


def _round_up(x, m):
    return (x + m - 1) // m * m


# ------------------------- Pallas kernels -------------------------


def _matmul_bias_kernel(x_ref, w_ref, b_ref, o_ref, *, relu, k_steps):
    """One (tm, tn) output tile.  K-axis accumulation goes directly into the
    resident f32 output block: bias init at k==0, MXU dot (bf16 operands,
    f32 accumulation) every step, ReLU on the last k step."""
    k = pl.program_id(2)

    @pl.when(k == 0)
    def _():
        o_ref[...] = jnp.broadcast_to(b_ref[...], o_ref.shape)

    o_ref[...] += jnp.dot(x_ref[...], w_ref[...],
                          preferred_element_type=jnp.float32)

    if relu:
        @pl.when(k == k_steps - 1)
        def _():
            o_ref[...] = jnp.maximum(o_ref[...], 0.0)


def pallas_matmul_bias(x, w, b, *, relu):
    """(M, K) @ (K, N) + b with optional fused ReLU.

    Operands are cast to bf16 (MXU-native); accumulation, bias and ReLU stay
    f32.  Tiles are picked statically per call:
      * tn = N (full / lane-dense) when N <= 512, else 512
      * tm ~= ceil(M / n_tiles) rounded to 16, capped at 512
      * tk = full K whenever the (tk, tn) weight block fits a ~7 MiB budget
        (every conv in this net => single K step), else the largest
        128-multiple divisor of K under the budget (fc6 -> 6272).
    Weight / bias padding is never needed for this network, so no per-call
    HBM copies of the weights.
    """
    M, K = x.shape
    Kw, N = w.shape
    assert K == Kw
    x = x.astype(jnp.bfloat16)
    w = w.astype(jnp.bfloat16)
    b = b.reshape(1, N).astype(jnp.float32)

    # ---- static tile selection ----
    tn = N if N <= 512 else 512
    Np = _round_up(N, tn)

    n_mt = -(-M // 512)
    tm = _round_up(-(-M // n_mt), 16)
    Mp = n_mt * tm

    itemsize = 2  # bf16
    budget = 7 << 20
    if K * tn * itemsize <= budget:
        Kp = _round_up(K, 16)
        tk = Kp
    else:
        cap = max(128, (budget // (tn * itemsize)) // 128 * 128)
        tk = None
        for cand in range(cap, 0, -128):
            if K % cand == 0:
                tk = cand
                break
        if tk is None:
            tk = min(cap, 512)
        Kp = _round_up(K, tk)

    if Mp != M or Kp != K:
        x = jnp.pad(x, ((0, Mp - M), (0, Kp - K)))
    if Kp != K or Np != N:
        w = jnp.pad(w, ((0, Kp - K), (0, Np - N)))
    if Np != N:
        b = jnp.pad(b, ((0, 0), (0, Np - N)))

    grid = (Mp // tm, Np // tn, Kp // tk)
    kernel = functools.partial(_matmul_bias_kernel, relu=relu, k_steps=grid[2])
    out = pl.pallas_call(
        kernel,
        out_shape=jax.ShapeDtypeStruct((Mp, Np), jnp.float32),
        grid=grid,
        in_specs=[
            pl.BlockSpec((tm, tk), lambda i, j, k: (i, k)),
            pl.BlockSpec((tk, tn), lambda i, j, k: (k, j)),
            pl.BlockSpec((1, tn), lambda i, j, k: (0, j)),
        ],
        out_specs=pl.BlockSpec((tm, tn), lambda i, j, k: (i, j)),
        compiler_params=pltpu.CompilerParams(
            dimension_semantics=("parallel", "parallel", "arbitrary"),
            vmem_limit_bytes=48 * 1024 * 1024),
    )(x, w, b)
    if Mp != M or Np != N:
        out = out[:M, :N]
    return out


def _max4_kernel(a_ref, b_ref, c_ref, d_ref, o_ref):
    o_ref[...] = jnp.maximum(jnp.maximum(a_ref[...], b_ref[...]),
                             jnp.maximum(c_ref[...], d_ref[...]))


def pallas_max4(a, b, c, d, *, tr=512):
    """Elementwise max of four (M, C) f32 arrays (2x2 max-pool hot path)."""
    M, C = a.shape
    tr = min(tr, _round_up(M, 8))
    Mp = _round_up(M, tr)
    if Mp != M:
        pad = lambda z: jnp.pad(z, ((0, Mp - M), (0, 0)))
        a, b, c, d = pad(a), pad(b), pad(c), pad(d)
    # Lane-dense view for narrow channel counts (avoid masked partial stores).
    Mk, Ck, trk = Mp, C, tr
    if C < 128 and (Mp * C) % 128 == 0 and (tr * C) % 128 == 0:
        Ck = 128
        Mk = Mp * C // 128
        trk = tr * C // 128
        rs = lambda z: z.reshape(Mk, Ck)
        a, b, c, d = rs(a), rs(b), rs(c), rs(d)
    out = pl.pallas_call(
        _max4_kernel,
        out_shape=jax.ShapeDtypeStruct((Mk, Ck), jnp.float32),
        grid=(Mk // trk,),
        in_specs=[pl.BlockSpec((trk, Ck), lambda i: (i, 0))] * 4,
        out_specs=pl.BlockSpec((trk, Ck), lambda i: (i, 0)),
        compiler_params=pltpu.CompilerParams(
            dimension_semantics=("parallel",)),
    )(a, b, c, d)
    return out.reshape(Mp, C)[:M]


# --------------------------- Layer glue ---------------------------


def conv2d(x, wm, b, *, ksize, padding, relu):
    """x: (N,H,W,Cin) NHWC; wm: (ksize*ksize*Cin, Cout) bf16 matmul weight
    (rows ordered (dy, dx, cin) to match the im2col below); b: (Cout,) f32."""
    N, H, W, Cin = x.shape
    Cout = wm.shape[1]
    xp = x
    if padding:
        xp = jnp.pad(x, ((0, 0), (padding, padding), (padding, padding), (0, 0)))
    Ho = H + 2 * padding - ksize + 1
    Wo = W + 2 * padding - ksize + 1
    if ksize == 1:
        cols = xp.reshape(N * Ho * Wo, Cin)
    else:
        patches = [xp[:, dy:dy + Ho, dx:dx + Wo, :]
                   for dy in range(ksize) for dx in range(ksize)]
        cols = jnp.concatenate(patches, axis=-1).reshape(
            N * Ho * Wo, ksize * ksize * Cin)
    # TODO(synk): fold the (dy, dx) patch loop into the matmul K grid axis so
    # the conv reads the activation directly instead of a k*k-expanded im2col
    # blob in HBM.
    cols = cols.astype(jnp.bfloat16)
    out = pallas_matmul_bias(cols, wm, b, relu=relu)
    return out.reshape(N, Ho, Wo, Cout)


def maxpool2x2_ceil(x):
    """nn.MaxPool2d(2, stride=2, ceil_mode=True) on NHWC."""
    N, H, W, C = x.shape
    Ho, Wo = -(-H // 2), -(-W // 2)
    xp = x
    if (2 * Ho - H) or (2 * Wo - W):
        xp = jnp.pad(x, ((0, 0), (0, 2 * Ho - H), (0, 2 * Wo - W), (0, 0)),
                     constant_values=-jnp.inf)
    a = xp[:, 0::2, 0::2, :].reshape(-1, C)
    b = xp[:, 0::2, 1::2, :].reshape(-1, C)
    c = xp[:, 1::2, 0::2, :].reshape(-1, C)
    d = xp[:, 1::2, 1::2, :].reshape(-1, C)
    # TODO(synk): replace the 4 strided views with a single reshaped-block
    # pooling kernel to avoid the strided HBM gathers entirely.
    return pallas_max4(a, b, c, d).reshape(N, Ho, Wo, C)


def _bilinear_1d(k):
    factor = (k + 1) // 2
    center = factor - 1 if k % 2 == 1 else factor - 0.5
    og = np.arange(k, dtype=np.float64)
    return (1.0 - np.abs(og - center) / factor).astype(np.float32)


def upscore_bilinear(x, *, kernel_size=64, stride=32):
    """ConvTranspose2d(C, C, 64, stride=32, bias=False) with the channel-
    diagonal bilinear weight installed by initialize_weight().  The bilinear
    kernel is exactly separable, so the transposed conv is two small 1-D
    upsampling matmuls (no dense scatter matrix).
    x: (N, Hin, Win, C) NHWC -> (N, C, Hout, Wout) NCHW."""
    N, Hin, Win, C = x.shape
    Hout = (Hin - 1) * stride + kernel_size
    Wout = (Win - 1) * stride + kernel_size
    f1 = _bilinear_1d(kernel_size)

    def up_matrix(n_in, n_out):
        U = np.zeros((n_out, n_in), np.float32)
        for i in range(n_in):
            U[i * stride:i * stride + kernel_size, i] = f1
        return jnp.asarray(U)

    Uh = up_matrix(Hin, Hout)                       # (Hout, Hin)
    Uw = up_matrix(Win, Wout)                       # (Wout, Win)
    # rows: out[ho] = sum_hi Uh[ho, hi] * x[hi]
    xm = jnp.transpose(x, (1, 0, 2, 3)).reshape(Hin, N * Win * C)
    y = pallas_matmul_bias(Uh, xm, jnp.zeros((N * Win * C,), jnp.float32),
                           relu=False)
    y = y.reshape(Hout, N, Win, C)
    # cols: out[wo] = sum_wi Uw[wo, wi] * y[wi]
    ym = jnp.transpose(y, (2, 1, 0, 3)).reshape(Win, N * Hout * C)
    z = pallas_matmul_bias(Uw, ym, jnp.zeros((N * Hout * C,), jnp.float32),
                           relu=False)
    z = z.reshape(Wout, N, Hout, C)
    return jnp.transpose(z, (1, 3, 2, 0))           # (N, C, Hout, Wout)


# ------------------------- Model definition -------------------------

_CONV_DEFS = [
    # (name, cout, cin, k, pad, relu)
    ("conv1_1", 64, 3, 3, 100, True), ("conv1_2", 64, 64, 3, 1, True),
    ("conv2_1", 128, 64, 3, 1, True), ("conv2_2", 128, 128, 3, 1, True),
    ("conv3_1", 256, 128, 3, 1, True), ("conv3_2", 256, 256, 3, 1, True),
    ("conv3_3", 256, 256, 3, 1, True),
    ("conv4_1", 384, 256, 3, 1, True), ("conv4_2", 384, 384, 3, 1, True),
    ("conv4_3", 384, 384, 3, 1, True),
    ("conv5_1", 384, 384, 3, 1, True), ("conv5_2", 384, 384, 3, 1, True),
    ("conv5_3", 384, 384, 3, 1, True),
]


def init_params(key, n_class):
    """Deterministic synthetic weights (He-scaled), stored pre-reshaped as
    (k*k*cin, cout) bf16 matmul operands + f32 bias, so the forward pass never
    pads or transposes a weight.  (The reference copies pretrained VGG16
    weights and zero-inits score_fr; here everything gets small random weights
    so the output is non-trivial.  Real checkpoints would be transposed with
    (2,3,1,0) and reshaped into the same (k*k*cin, cout) layout.)"""
    defs = list(_CONV_DEFS) + [
        ("fc6", 4096, 384, 7, 0, True),
        ("fc7", 4096, 4096, 1, 0, True),
        ("score_fr", n_class, 4096, 1, 0, False),
    ]
    params = {}
    keys = jax.random.split(key, len(defs))
    for kk, (name, cout, cin, ksz, _pad, _relu) in zip(keys, defs):
        fan_in = cin * ksz * ksz
        kw_, kb_ = jax.random.split(kk)
        wm = (jax.random.normal(kw_, (fan_in, cout), jnp.float32)
              * np.sqrt(2.0 / fan_in)).astype(jnp.bfloat16)
        b = 0.01 * jax.random.normal(kb_, (cout,), jnp.float32)
        params[name] = (wm, b, ksz)
    return params


def fcn32s_forward(x_nchw, params):
    x = jnp.transpose(x_nchw, (0, 2, 3, 1)).astype(jnp.float32)  # NCHW -> NHWC
    h_in, w_in = x.shape[1], x.shape[2]

    h = x
    pool_after = {"conv1_2", "conv2_2", "conv3_3", "conv4_3", "conv5_3"}
    for name, _cout, _cin, _k, pad, relu in _CONV_DEFS:
        wm, b, ksz = params[name]
        h = conv2d(h, wm, b, ksize=ksz, padding=pad, relu=relu)
        if name in pool_after:
            h = maxpool2x2_ceil(h)

    wm, b, ksz = params["fc6"]
    h = conv2d(h, wm, b, ksize=ksz, padding=0, relu=True)
    # TODO(synk): drop6/drop7 (nn.Dropout2d) implemented as eval-mode identity.
    wm, b, ksz = params["fc7"]
    h = conv2d(h, wm, b, ksize=ksz, padding=0, relu=True)
    wm, b, ksz = params["score_fr"]
    h = conv2d(h, wm, b, ksize=ksz, padding=0, relu=False)

    h = upscore_bilinear(h, kernel_size=64, stride=32)       # NCHW
    h = h[:, :, 19:19 + h_in, 19:19 + w_in]                  # same crop as ref
    return h


if __name__ == "__main__":
    n_class = 4
    batch, in_ch, spatial = 1, 3, 16   # 16x16 input -> 7x7 at pool5 (valid fc6)

    key = jax.random.PRNGKey(0)
    k_x, k_p = jax.random.split(key)
    x = jax.random.normal(k_x, (batch, in_ch, spatial, spatial), jnp.float32)
    params = init_params(k_p, n_class)

    out = fcn32s_forward(x, params)
    out = jax.block_until_ready(out)

    assert out.shape == (batch, n_class, spatial, spatial), out.shape
    assert bool(jnp.all(jnp.isfinite(out)))
    print("KERNEL_OK")
</pallas_src>

<mosaic_0001>
module attributes {stable_mosaic.version = 11 : i64} {
  func.func @_matmul_bias_kernel(%arg0: i32, %arg1: i32, %arg2: i32, %arg3: memref<512x32xbf16, #tpu.memory_space<vmem>>, %arg4: memref<32x64xbf16, #tpu.memory_space<vmem>>, %arg5: memref<1x64xf32, #tpu.memory_space<vmem>>, %arg6: memref<512x64xf32, #tpu.memory_space<vmem>>) attributes {dimension_semantics = [#tpu.dimension_semantics<parallel>, #tpu.dimension_semantics<parallel>, #tpu.dimension_semantics<arbitrary>], iteration_bounds = array<i64: 90, 1, 1>, scalar_prefetch = 0 : i64, scratch_operands = 0 : i64, tpu.core_type = #tpu.core_type<tc>, window_params = [{transform_indices = @transform_0, window_bounds = array<i64: 512, 32>}, {transform_indices = @transform_1, window_bounds = array<i64: 32, 64>}, {transform_indices = @transform_2, window_bounds = array<i64: 1, 64>}, {transform_indices = @transform_3, window_bounds = array<i64: 512, 64>}]} {
    %c0_i32 = arith.constant 0 : i32
    %0 = arith.cmpi eq, %arg2, %c0_i32 : i32
    %1 = arith.extui %0 : i1 to i32
    %c0_i32_0 = arith.constant 0 : i32
    %2 = arith.cmpi ne, %1, %c0_i32_0 : i32
    scf.if %2 {
      %c0_10 = arith.constant 0 : index
      %c0_11 = arith.constant 0 : index
      %12 = vector.load %arg5[%c0_10, %c0_11] : memref<1x64xf32, #tpu.memory_space<vmem>>, vector<1x64xf32>
      %13 = vector.shape_cast %12 : vector<1x64xf32> to vector<1x64xf32>
      %14 = vector.broadcast %13 : vector<1x64xf32> to vector<512x64xf32>
      %c0_12 = arith.constant 0 : index
      %c0_13 = arith.constant 0 : index
      %15 = vector.load %arg6[%c0_12, %c0_13] : memref<512x64xf32, #tpu.memory_space<vmem>>, vector<512x64xf32>
      tpu.vector_store %arg6[%c0_12, %c0_13], %14 {strides = array<i32>} : memref<512x64xf32, #tpu.memory_space<vmem>>, vector<512x64xf32>,
    } else {
    }
    %c0 = arith.constant 0 : index
    %c0_1 = arith.constant 0 : index
    %3 = vector.load %arg6[%c0, %c0_1] : memref<512x64xf32, #tpu.memory_space<vmem>>, vector<512x64xf32>
    %c0_2 = arith.constant 0 : index
    %c0_3 = arith.constant 0 : index
    %4 = vector.load %arg3[%c0_2, %c0_3] : memref<512x32xbf16, #tpu.memory_space<vmem>>, vector<512x32xbf16>
    %c0_4 = arith.constant 0 : index
    %c0_5 = arith.constant 0 : index
    %5 = vector.load %arg4[%c0_4, %c0_5] : memref<32x64xbf16, #tpu.memory_space<vmem>>, vector<32x64xbf16>
    %cst = arith.constant dense<0.000000e+00> : vector<512x64xf32>
    %6 = tpu.matmul %4, %5, %cst {dimension_numbers = #tpu.dot_dimension_numbers<[1], [0], [0], [1], [0, 0, 1, 1], [], []>} : vector<512x32xbf16>, vector<32x64xbf16>, vector<512x64xf32> -> vector<512x64xf32>
    %7 = arith.addf %3, %6 : vector<512x64xf32>
    %c0_6 = arith.constant 0 : index
    %c0_7 = arith.constant 0 : index
    %8 = vector.load %arg6[%c0_6, %c0_7] : memref<512x64xf32, #tpu.memory_space<vmem>>, vector<512x64xf32>
    tpu.vector_store %arg6[%c0_6, %c0_7], %7 {strides = array<i32>} : memref<512x64xf32, #tpu.memory_space<vmem>>, vector<512x64xf32>,
    %c0_i32_8 = arith.constant 0 : i32
    %9 = arith.cmpi eq, %arg2, %c0_i32_8 : i32
    %10 = arith.extui %9 : i1 to i32
    %c0_i32_9 = arith.constant 0 : i32
    %11 = arith.cmpi ne, %10, %c0_i32_9 : i32
    scf.if %11 {
      %c0_10 = arith.constant 0 : index
      %c0_11 = arith.constant 0 : index
      %12 = vector.load %arg6[%c0_10, %c0_11] : memref<512x64xf32, #tpu.memory_space<vmem>>, vector<512x64xf32>
      %cst_12 = arith.constant 0.000000e+00 : f32
      %13 = vector.broadcast %cst_12 : f32 to vector<512x64xf32>
      %14 = arith.maximumf %12, %13 : vector<512x64xf32>
      %c0_13 = arith.constant 0 : index
      %c0_14 = arith.constant 0 : index
      %15 = vector.load %arg6[%c0_13, %c0_14] : memref<512x64xf32, #tpu.memory_space<vmem>>, vector<512x64xf32>
      tpu.vector_store %arg6[%c0_13, %c0_14], %14 {strides = array<i32>} : memref<512x64xf32, #tpu.memory_space<vmem>>, vector<512x64xf32>,
    } else {
    }
    return
  }
  func.func @transform_0(%arg0: i32, %arg1: i32, %arg2: i32) -> (i32, i32) {
    %c0_i32 = arith.constant 0 : i32
    return %arg0, %arg2 : i32, i32
  }
  func.func @transform_1(%arg0: i32, %arg1: i32, %arg2: i32) -> (i32, i32) {
    %c0_i32 = arith.constant 0 : i32
    return %arg2, %arg1 : i32, i32
  }
  func.func @transform_2(%arg0: i32, %arg1: i32, %arg2: i32) -> (i32, i32) {
    %c0_i32 = arith.constant 0 : i32
    %c0_i32_0 = arith.constant 0 : i32
    return %c0_i32, %arg1 : i32, i32
  }
  func.func @transform_3(%arg0: i32, %arg1: i32, %arg2: i32) -> (i32, i32) {
    %c0_i32 = arith.constant 0 : i32
    return %arg0, %arg1 : i32, i32
  }
}

</mosaic_0001>

<llo_original>
// kernel: tpu_custom_call.1
$region0: #{tpu_custom_call.1}
  #allocation0 [shape = 'u32[]', space=smem, size = 0x4, offset = 0x4, fixed_abs, tag = 'smem constant byte address 0x4 - core index']
  #allocation1 [shape = 'u32[72,128]{1,0:T(1,128)}', space=vmem, size = 0x9000, scoped, tag = 'internal scratch']
  %s0 = inlined_call_operand.vmem [shape: bf16[46080,32], index: 0, kind: input, shape index: {}]
  %s1 = inlined_call_operand.vmem [shape: bf16[32,64], index: 1, kind: input, shape index: {}]
  %s2 = inlined_call_operand.vmem [shape: f32[1,64], index: 2, kind: input, shape index: {}]
  %s3 = inlined_call_operand.vmem [shape: f32[46080,64], index: 3, kind: output, shape index: {}]
  %s4 = sld [smem:[#allocation0]]
  $region53: #{tpu_custom_call.1} parent=0
    _
  %s6 = ssub.s32 1, %s4
  %s7 = scalar_select 0, %s6, %s4
  loop: start=0, step=1, limit=92
  $region2: #{tpu_custom_call.1} parent=0 // loop_pre_header
    _
  $region3: #{tpu_custom_call.1} parent=0 // loop_header
    %s9 = sphi 0, %s13
    %p10 = scmp.ge.s32.totalorder %s9, 92
    %s16 = sphi 0, %s35
    %s17 = sphi 0, %s31
    %s18 = sphi 0, %s27
    %s19 = sphi 0, %s16
    %s20 = sphi 0, %s17
    %s21 = sphi 0, %s18
    %s22 = sphi 0, %s19
    %s23 = sphi 0, %s20
    %s24 = sphi 0, %s21
    %s40 = sphi 0, %s42
    %s43 = sphi 0, %s40
    %s44 = sphi 0, %s43
    %s60 = sphi 0, %s44
    %s68 = sphi 0, %s70
    %s71 = sphi 0, %s68
    %s72 = sphi 0, %s71
    %s88 = sphi 0, %s72
    %s94 = sphi 0, %s96
    %s97 = sphi 0, %s94
    %s98 = sphi 0, %s97
    %s114 = sphi 0, %s98
    %s122 = sphi 0, %s124
    %s125 = sphi 0, %s122
    %s126 = sphi 0, %s125
    %s142 = sphi 0, %s126
  $region4: #{tpu_custom_call.1} parent=0 // loop_header_branch
    %12 = sbr.rel (%p10) target = $region8
  $region5: #{tpu_custom_call.1} parent=0 // loop_body
    %s14 = ssub.s32 %s9, 1
    %s15 = ssub.s32 %s9, 2
    %s25 = sadd.s32 1, %s18
    %p26 = scmp.ge.s32.totalorder %s25, 1
    %s27 = scalar_select %p26, 0, %s25
    %s28 = sadd.s32 1, %s17
    %s29 = scalar_select %p26, %s28, %s17
    %p30 = scmp.ge.s32.totalorder %s29, 1
    %s31 = scalar_select %p30, 0, %s29
    %s32 = sadd.s32 1, %s16
    %s33 = scalar_select %p30, %s32, %s16
    %p34 = scmp.ge.s32.totalorder %s33, 90
    %s35 = scalar_select %p34, 0, %s33
    %s36 = ssub.s32 %s16, %s35
    %s37 = ssub.s32 %s18, %s27
    %s38 = sor.u32 %s36, %s37
    %p39 = scmp.eq.s32.totalorder %s38, 0
    %s41 = sadd.s32 %s40, 1
    %s42 = scalar_select %p39, %s40, %s41
    %p45 = pneg %p39
    %p46 = scmp.eq.s32.totalorder %s9, 89
    %p47 = por %p45, %p46
    %p48 = scmp.ne.s32.totalorder %s40, %s43
    %p49 = scmp.eq.s32.totalorder %s9, 0
    %p50 = por %p48, %p49
    %p51 = scmp.ne.s32.totalorder %s40, %s43
    %p52 = scmp.eq.s32.totalorder %s14, 89
    %p53 = por %p51, %p52
    %p54 = scmp.ne.s32.totalorder %s43, %s44
    %p55 = scmp.eq.s32.totalorder %s14, 0
    %p56 = por %p54, %p55
    %p57 = scmp.ne.s32.totalorder %s43, %s44
    %p58 = scmp.eq.s32.totalorder %s15, 89
    %p59 = por %p57, %p58
    %p61 = scmp.ne.s32.totalorder %s44, %s60
    %p62 = scmp.eq.s32.totalorder %s15, 0
    %p63 = por %p61, %p62
    %s64 = ssub.s32 %s18, %s27
    %s65 = ssub.s32 %s17, %s31
    %s66 = sor.u32 %s64, %s65
    %p67 = scmp.eq.s32.totalorder %s66, 0
    %s69 = sadd.s32 %s68, 1
    %s70 = scalar_select %p67, %s68, %s69
    %p73 = pneg %p67
    %p74 = scmp.eq.s32.totalorder %s9, 89
    %p75 = por %p73, %p74
    %p76 = scmp.ne.s32.totalorder %s68, %s71
    %p77 = scmp.eq.s32.totalorder %s9, 0
    %p78 = por %p76, %p77
    %p79 = scmp.ne.s32.totalorder %s68, %s71
    %p80 = scmp.eq.s32.totalorder %s14, 89
    %p81 = por %p79, %p80
    %p82 = scmp.ne.s32.totalorder %s71, %s72
    %p83 = scmp.eq.s32.totalorder %s14, 0
    %p84 = por %p82, %p83
    %p85 = scmp.ne.s32.totalorder %s71, %s72
    %p86 = scmp.eq.s32.totalorder %s15, 89
    %p87 = por %p85, %p86
    %p89 = scmp.ne.s32.totalorder %s72, %s88
    %p90 = scmp.eq.s32.totalorder %s15, 0
    %p91 = por %p89, %p90
    %s92 = ssub.s32 %s17, %s31
    %p93 = scmp.eq.s32.totalorder %s92, 0
    %s95 = sadd.s32 %s94, 1
    %s96 = scalar_select %p93, %s94, %s95
    %p99 = pneg %p93
    %p100 = scmp.eq.s32.totalorder %s9, 89
    %p101 = por %p99, %p100
    %p102 = scmp.ne.s32.totalorder %s94, %s97
    %p103 = scmp.eq.s32.totalorder %s9, 0
    %p104 = por %p102, %p103
    %p105 = scmp.ne.s32.totalorder %s94, %s97
    %p106 = scmp.eq.s32.totalorder %s14, 89
    %p107 = por %p105, %p106
    %p108 = scmp.ne.s32.totalorder %s97, %s98
    %p109 = scmp.eq.s32.totalorder %s14, 0
    %p110 = por %p108, %p109
    %p111 = scmp.ne.s32.totalorder %s97, %s98
    %p112 = scmp.eq.s32.totalorder %s15, 89
    %p113 = por %p111, %p112
    %p115 = scmp.ne.s32.totalorder %s98, %s114
    %p116 = scmp.eq.s32.totalorder %s15, 0
    %p117 = por %p115, %p116
    %s118 = ssub.s32 %s16, %s35
    %s119 = ssub.s32 %s17, %s31
    %s120 = sor.u32 %s118, %s119
    %p121 = scmp.eq.s32.totalorder %s120, 0
    %s123 = sadd.s32 %s122, 1
    %s124 = scalar_select %p121, %s122, %s123
    %p127 = pneg %p121
    %p128 = scmp.eq.s32.totalorder %s9, 89
    %p129 = por %p127, %p128
    %p130 = scmp.ne.s32.totalorder %s122, %s125
    %p131 = scmp.eq.s32.totalorder %s9, 0
    %p132 = por %p130, %p131
    %p133 = scmp.ne.s32.totalorder %s122, %s125
    %p134 = scmp.eq.s32.totalorder %s14, 89
    %p135 = por %p133, %p134
    %p136 = scmp.ne.s32.totalorder %s125, %s126
    %p137 = scmp.eq.s32.totalorder %s14, 0
    %p138 = por %p136, %p137
    %p139 = scmp.ne.s32.totalorder %s125, %s126
    %p140 = scmp.eq.s32.totalorder %s15, 89
    %p141 = por %p139, %p140
    %p143 = scmp.ne.s32.totalorder %s126, %s142
    %p144 = scmp.eq.s32.totalorder %s15, 0
    %p145 = por %p143, %p144
    %p146 = scmp.le.s32.totalorder 1, %s9
    %p147 = scmp.lt.s32.totalorder %s9, 91
    %p148 = pnand %p146, %p147
    %p149 = pneg %p148
    // Predicated region
    $region9: #{tpu_custom_call.1} parent=5 // pred_check
      _
    $region10: #{tpu_custom_call.1} parent=5 // pred_check_branch
      %151 = sbr.rel (%p148) target = $region12
    $region11: #{tpu_custom_call.1} parent=5 // pred_region
      %s152 = ssub.s32 %s9, 1
      // Predicated region
      $region13: #{tpu_custom_call.1} parent=11 // pred_check
        %p153 = pneg %p84
      $region14: #{tpu_custom_call.1} parent=11 // pred_check_branch
        %155 = sbr.rel (%p153) target = $region16
      $region15: #{tpu_custom_call.1} parent=11 // pred_region
        %s156 = smul.u32 4, %s21
        %p157 = scmp.lt.s32.totalorder %s156, 3
        %s158 = scalar_select %p157, %s156, 3
        %p159 = scmp.lt.s32.totalorder %s20, 0
        %s160 = scalar_select %p159, %s20, 0
        %s161 = sadd.s32 %s160, %s158
        %s162 = smul.addr %s161, 4
        %s163 = scalar_lea.vmem %s1, %s162
        %s164 = smul.u32 4, %s21
      $region16: #{tpu_custom_call.1} parent=11 // pred_fallthru
        _
      // Predicated region
      $region17: #{tpu_custom_call.1} parent=11 // pred_check
        %p165 = pneg %p110
      $region18: #{tpu_custom_call.1} parent=11 // pred_check_branch
        %167 = sbr.rel (%p165) target = $region20
      $region19: #{tpu_custom_call.1} parent=11 // pred_region
        %p168 = scmp.lt.s32.totalorder %s20, 0
        %s169 = scalar_select %p168, %s20, 0
        %s170 = scalar_lea.vmem %s2, %s169
      $region20: #{tpu_custom_call.1} parent=11 // pred_fallthru
        _
    $region12: #{tpu_custom_call.1} parent=5 // pred_fallthru
      _
    %p171 = scmp.lt.s32.totalorder %s9, 90
    // Predicated region
    $region21: #{tpu_custom_call.1} parent=5 // pred_check
      %p172 = pneg %p171
    $region22: #{tpu_custom_call.1} parent=5 // pred_check_branch
      %174 = sbr.rel (%p172) target = $region24
    $region23: #{tpu_custom_call.1} parent=5 // pred_region
      // Predicated region
      $region25: #{tpu_custom_call.1} parent=23 // pred_check
        %p175 = pneg %p50
      $region26: #{tpu_custom_call.1} parent=23 // pred_check_branch
        %177 = sbr.rel (%p175) target = $region28
      $region27: #{tpu_custom_call.1} parent=23 // pred_region
        %s178 = smul.u32 64, %s16
        %p179 = scmp.lt.s32.totalorder %s178, 5759
        %s180 = scalar_select %p179, %s178, 5759
        %p181 = scmp.lt.s32.totalorder %s18, 0
        %s182 = scalar_select %p181, %s18, 0
        %s183 = sadd.s32 %s182, %s180
        %s184 = smul.addr %s183, 4
        %s185 = scalar_lea.vmem %s0, %s184
        %s186 = smul.u32 64, %s16
      $region28: #{tpu_custom_call.1} parent=23 // pred_fallthru
        _
    $region24: #{tpu_custom_call.1} parent=5 // pred_fallthru
      _
    %p187 = scmp.le.s32.totalorder 1, %s9
    %p188 = scmp.lt.s32.totalorder %s9, 91
    %p189 = pnand %p187, %p188
    %p190 = pneg %p189
    // Predicated region
    $region29: #{tpu_custom_call.1} parent=5 // pred_check
      _
    $region30: #{tpu_custom_call.1} parent=5 // pred_check_branch
      %192 = sbr.rel (%p189) target = $region32
    $region31: #{tpu_custom_call.1} parent=5 // pred_region
      %s193 = ssub.s32 %s9, 1
      %s194 = smul.u32 64, %s19
      %p195 = scmp.lt.s32.totalorder %s194, 5759
      %s196 = scalar_select %p195, %s194, 5759
      %p197 = scmp.lt.s32.totalorder %s21, 0
      %s198 = scalar_select %p197, %s21, 0
      %s199 = sadd.s32 %s198, %s196
      %s200 = smul.addr %s199, 4
      %s201 = scalar_lea.vmem %s0, %s200
      %p202 = pneg %p56
      %p203 = pneg %p53
      %s204 = smul.u32 4, %s21
      %p205 = scmp.lt.s32.totalorder %s204, 3
      %s206 = scalar_select %p205, %s204, 3
      %p207 = scmp.lt.s32.totalorder %s20, 0
      %s208 = scalar_select %p207, %s20, 0
      %s209 = sadd.s32 %s208, %s206
      %s210 = smul.addr %s209, 4
      %s211 = scalar_lea.vmem %s1, %s210
      %p212 = pneg %p84
      %p213 = pneg %p81
      %p214 = scmp.lt.s32.totalorder %s20, 0
      %s215 = scalar_select %p214, %s20, 0
      %s216 = scalar_lea.vmem %s2, %s215
      %p217 = pneg %p110
      %p218 = pneg %p107
      %p219 = pneg %p138
      %p220 = pneg %p135
      %s221 = smul.u32 64, %s19
      %p222 = scmp.lt.s32.totalorder %s221, 5759
      %s223 = scalar_select %p222, %s221, 5759
      %p224 = scmp.lt.s32.totalorder %s20, 0
      %s225 = scalar_select %p224, %s20, 0
      %s226 = sadd.s32 %s225, %s223
      %s227 = smul.addr %s226, 8
      %s228 = scalar_lea.vmem %s3, %s227
      %s229 = smul.u32 64, %s19
      %p230 = scmp.lt.s32.totalorder %s229, 5759
      %s231 = scalar_select %p230, %s229, 5759
      %p232 = scmp.lt.s32.totalorder %s21, 0
      %s233 = scalar_select %p232, %s21, 0
      %s234 = sadd.s32 %s233, %s231
      %s235 = smul.addr %s234, 4
      %s236 = scalar_lea.vmem %s0, %s235
      %s237 = smul.u32 64, %s19
      %s238 = smul.u32 4, %s21
      %p239 = scmp.lt.s32.totalorder %s238, 3
      %s240 = scalar_select %p239, %s238, 3
      %p241 = scmp.lt.s32.totalorder %s20, 0
      %s242 = scalar_select %p241, %s20, 0
      %s243 = sadd.s32 %s242, %s240
      %s244 = smul.addr %s243, 4
      %s245 = scalar_lea.vmem %s1, %s244
      %s246 = smul.u32 4, %s21
      %p247 = scmp.lt.s32.totalorder %s20, 0
      %s248 = scalar_select %p247, %s20, 0
      %s249 = scalar_lea.vmem %s2, %s248
      %s250 = smul.u32 64, %s19
      %p251 = scmp.lt.s32.totalorder %s250, 5759
      %s252 = scalar_select %p251, %s250, 5759
      %p253 = scmp.lt.s32.totalorder %s20, 0
      %s254 = scalar_select %p253, %s20, 0
      %s255 = sadd.s32 %s254, %s252
      %s256 = smul.addr %s255, 8
      %s257 = scalar_lea.vmem %s3, %s256
      %s258 = smul.u32 64, %s19
      %p260 = scmp.eq.s32.totalorder %s21, 0
      // Predicated region
      $region33: #{tpu_custom_call.1} parent=31 // pred_check
        %p261 = pneg %p260
      $region34: #{tpu_custom_call.1} parent=31 // pred_check_branch
        %263 = sbr.rel (%p261) target = $region36
      $region35: #{tpu_custom_call.1} parent=31 // pred_region
        %v264 = vld [vmem:[%s249] sm:$0x1]
        %v266 = vperm.slane %v264, 0
        %vm268 = vcmask 523264
        %269 = vst.msk [vmem:[%s257] sm:$0xff] %vm268, %v266
        %270 = vst.msk [vmem:[%s257 + $0x8] sm:$0xff] %vm268, %v266
        %271 = vst.msk [vmem:[%s257 + $0x10] sm:$0xff] %vm268, %v266
        %272 = vst.msk [vmem:[%s257 + $0x18] sm:$0xff] %vm268, %v266
        %273 = vst.msk [vmem:[%s257 + $0x20] sm:$0xff] %vm268, %v266
        %274 = vst.msk [vmem:[%s257 + $0x28] sm:$0xff] %vm268, %v266
        %275 = vst.msk [vmem:[%s257 + $0x30] sm:$0xff] %vm268, %v266
        %276 = vst.msk [vmem:[%s257 + $0x38] sm:$0xff] %vm268, %v266
        %277 = vst.msk [vmem:[%s257 + $0x40] sm:$0xff] %vm268, %v266
        %278 = vst.msk [vmem:[%s257 + $0x48] sm:$0xff] %vm268, %v266
        %279 = vst.msk [vmem:[%s257 + $0x50] sm:$0xff] %vm268, %v266
        %280 = vst.msk [vmem:[%s257 + $0x58] sm:$0xff] %vm268, %v266
        %281 = vst.msk [vmem:[%s257 + $0x60] sm:$0xff] %vm268, %v266
        %282 = vst.msk [vmem:[%s257 + $0x68] sm:$0xff] %vm268, %v266
        %283 = vst.msk [vmem:[%s257 + $0x70] sm:$0xff] %vm268, %v266
        %284 = vst.msk [vmem:[%s257 + $0x78] sm:$0xff] %vm268, %v266
        %285 = vst.msk [vmem:[%s257 + $0x80] sm:$0xff] %vm268, %v266
        %286 = vst.msk [vmem:[%s257 + $0x88] sm:$0xff] %vm268, %v266
        %287 = vst.msk [vmem:[%s257 + $0x90] sm:$0xff] %vm268, %v266
        %288 = vst.msk [vmem:[%s257 + $0x98] sm:$0xff] %vm268, %v266
        %289 = vst.msk [vmem:[%s257 + $0xa0] sm:$0xff] %vm268, %v266
        %290 = vst.msk [vmem:[%s257 + $0xa8] sm:$0xff] %vm268, %v266
        %291 = vst.msk [vmem:[%s257 + $0xb0] sm:$0xff] %vm268, %v266
        %292 = vst.msk [vmem:[%s257 + $0xb8] sm:$0xff] %vm268, %v266
        %293 = vst.msk [vmem:[%s257 + $0xc0] sm:$0xff] %vm268, %v266
        %294 = vst.msk [vmem:[%s257 + $0xc8] sm:$0xff] %vm268, %v266
        %295 = vst.msk [vmem:[%s257 + $0xd0] sm:$0xff] %vm268, %v266
        %296 = vst.msk [vmem:[%s257 + $0xd8] sm:$0xff] %vm268, %v266
        %297 = vst.msk [vmem:[%s257 + $0xe0] sm:$0xff] %vm268, %v266
        %298 = vst.msk [vmem:[%s257 + $0xe8] sm:$0xff] %vm268, %v266
        %299 = vst.msk [vmem:[%s257 + $0xf0] sm:$0xff] %vm268, %v266
        %300 = vst.msk [vmem:[%s257 + $0xf8] sm:$0xff] %vm268, %v266
        %301 = vst.msk [vmem:[%s257 + $0x100] sm:$0xff] %vm268, %v266
        %302 = vst.msk [vmem:[%s257 + $0x108] sm:$0xff] %vm268, %v266
        %303 = vst.msk [vmem:[%s257 + $0x110] sm:$0xff] %vm268, %v266
        %304 = vst.msk [vmem:[%s257 + $0x118] sm:$0xff] %vm268, %v266
        %305 = vst.msk [vmem:[%s257 + $0x120] sm:$0xff] %vm268, %v266
        %306 = vst.msk [vmem:[%s257 + $0x128] sm:$0xff] %vm268, %v266
        %307 = vst.msk [vmem:[%s257 + $0x130] sm:$0xff] %vm268, %v266
        %308 = vst.msk [vmem:[%s257 + $0x138] sm:$0xff] %vm268, %v266
        %309 = vst.msk [vmem:[%s257 + $0x140] sm:$0xff] %vm268, %v266
        %310 = vst.msk [vmem:[%s257 + $0x148] sm:$0xff] %vm268, %v266
        %311 = vst.msk [vmem:[%s257 + $0x150] sm:$0xff] %vm268, %v266
        %312 = vst.msk [vmem:[%s257 + $0x158] sm:$0xff] %vm268, %v266
        %313 = vst.msk [vmem:[%s257 + $0x160] sm:$0xff] %vm268, %v266
        %314 = vst.msk [vmem:[%s257 + $0x168] sm:$0xff] %vm268, %v266
        %315 = vst.msk [vmem:[%s257 + $0x170] sm:$0xff] %vm268, %v266
        %316 = vst.msk [vmem:[%s257 + $0x178] sm:$0xff] %vm268, %v266
        %317 = vst.msk [vmem:[%s257 + $0x180] sm:$0xff] %vm268, %v266
        %318 = vst.msk [vmem:[%s257 + $0x188] sm:$0xff] %vm268, %v266
        %319 = vst.msk [vmem:[%s257 + $0x190] sm:$0xff] %vm268, %v266
        %320 = vst.msk [vmem:[%s257 + $0x198] sm:$0xff] %vm268, %v266
        %321 = vst.msk [vmem:[%s257 + $0x1a0] sm:$0xff] %vm268, %v266
        %322 = vst.msk [vmem:[%s257 + $0x1a8] sm:$0xff] %vm268, %v266
        %323 = vst.msk [vmem:[%s257 + $0x1b0] sm:$0xff] %vm268, %v266
        %324 = vst.msk [vmem:[%s257 + $0x1b8] sm:$0xff] %vm268, %v266
        %325 = vst.msk [vmem:[%s257 + $0x1c0] sm:$0xff] %vm268, %v266
        %326 = vst.msk [vmem:[%s257 + $0x1c8] sm:$0xff] %vm268, %v266
        %327 = vst.msk [vmem:[%s257 + $0x1d0] sm:$0xff] %vm268, %v266
        %328 = vst.msk [vmem:[%s257 + $0x1d8] sm:$0xff] %vm268, %v266
        %329 = vst.msk [vmem:[%s257 + $0x1e0] sm:$0xff] %vm268, %v266
        %330 = vst.msk [vmem:[%s257 + $0x1e8] sm:$0xff] %vm268, %v266
        %331 = vst.msk [vmem:[%s257 + $0x1f0] sm:$0xff] %vm268, %v266
        %332 = vst.msk [vmem:[%s257 + $0x1f8] sm:$0xff] %vm268, %v266
      $region36: #{tpu_custom_call.1} parent=31 // pred_fallthru
        _
      %v333 = vld [vmem:[%s257] sm:$0xff]
      %v334 = vld [vmem:[%s257 + $0x8] sm:$0xff]
      %v335 = vld [vmem:[%s257 + $0x10] sm:$0xff]
      %v336 = vld [vmem:[%s257 + $0x18] sm:$0xff]
      %v337 = vld [vmem:[%s257 + $0x20] sm:$0xff]
      %v338 = vld [vmem:[%s257 + $0x28] sm:$0xff]
      %v339 = vld [vmem:[%s257 + $0x30] sm:$0xff]
      %v340 = vld [vmem:[%s257 + $0x38] sm:$0xff]
      %v341 = vld [vmem:[%s257 + $0x40] sm:$0xff]
      %v342 = vld [vmem:[%s257 + $0x48] sm:$0xff]
      %v343 = vld [vmem:[%s257 + $0x50] sm:$0xff]
      %v344 = vld [vmem:[%s257 + $0x58] sm:$0xff]
      %v345 = vld [vmem:[%s257 + $0x60] sm:$0xff]
      %v346 = vld [vmem:[%s257 + $0x68] sm:$0xff]
      %v347 = vld [vmem:[%s257 + $0x70] sm:$0xff]
      %v348 = vld [vmem:[%s257 + $0x78] sm:$0xff]
      %v349 = vld [vmem:[%s257 + $0x80] sm:$0xff]
      %v350 = vld [vmem:[%s257 + $0x88] sm:$0xff]
      %v351 = vld [vmem:[%s257 + $0x90] sm:$0xff]
      %v352 = vld [vmem:[%s257 + $0x98] sm:$0xff]
      %v353 = vld [vmem:[%s257 + $0xa0] sm:$0xff]
      %v354 = vld [vmem:[%s257 + $0xa8] sm:$0xff]
      %v355 = vld [vmem:[%s257 + $0xb0] sm:$0xff]
      %v356 = vld [vmem:[%s257 + $0xb8] sm:$0xff]
      %v357 = vld [vmem:[%s257 + $0xc0] sm:$0xff]
      %v358 = vld [vmem:[%s257 + $0xc8] sm:$0xff]
      %v359 = vld [vmem:[%s257 + $0xd0] sm:$0xff]
      %v360 = vld [vmem:[%s257 + $0xd8] sm:$0xff]
      %v361 = vld [vmem:[%s257 + $0xe0] sm:$0xff]
      %v362 = vld [vmem:[%s257 + $0xe8] sm:$0xff]
      %v363 = vld [vmem:[%s257 + $0xf0] sm:$0xff]
      %v364 = vld [vmem:[%s257 + $0xf8] sm:$0xff]
      %v365 = vld [vmem:[%s257 + $0x100] sm:$0xff]
      %v366 = vld [vmem:[%s257 + $0x108] sm:$0xff]
      %v367 = vld [vmem:[%s257 + $0x110] sm:$0xff]
      %v368 = vld [vmem:[%s257 + $0x118] sm:$0xff]
      %v369 = vld [vmem:[%s257 + $0x120] sm:$0xff]
      %v370 = vld [vmem:[%s257 + $0x128] sm:$0xff]
      %v371 = vld [vmem:[%s257 + $0x130] sm:$0xff]
      %v372 = vld [vmem:[%s257 + $0x138] sm:$0xff]
      %v373 = vld [vmem:[%s257 + $0x140] sm:$0xff]
      %v374 = vld [vmem:[%s257 + $0x148] sm:$0xff]
      %v375 = vld [vmem:[%s257 + $0x150] sm:$0xff]
      %v376 = vld [vmem:[%s257 + $0x158] sm:$0xff]
      %v377 = vld [vmem:[%s257 + $0x160] sm:$0xff]
      %v378 = vld [vmem:[%s257 + $0x168] sm:$0xff]
      %v379 = vld [vmem:[%s257 + $0x170] sm:$0xff]
      %v380 = vld [vmem:[%s257 + $0x178] sm:$0xff]
      %v381 = vld [vmem:[%s257 + $0x180] sm:$0xff]
      %v382 = vld [vmem:[%s257 + $0x188] sm:$0xff]
      %v383 = vld [vmem:[%s257 + $0x190] sm:$0xff]
      %v384 = vld [vmem:[%s257 + $0x198] sm:$0xff]
      %v385 = vld [vmem:[%s257 + $0x1a0] sm:$0xff]
      %v386 = vld [vmem:[%s257 + $0x1a8] sm:$0xff]
      %v387 = vld [vmem:[%s257 + $0x1b0] sm:$0xff]
      %v388 = vld [vmem:[%s257 + $0x1b8] sm:$0xff]
      %v389 = vld [vmem:[%s257 + $0x1c0] sm:$0xff]
      %v390 = vld [vmem:[%s257 + $0x1c8] sm:$0xff]
      %v391 = vld [vmem:[%s257 + $0x1d0] sm:$0xff]
      %v392 = vld [vmem:[%s257 + $0x1d8] sm:$0xff]
      %v393 = vld [vmem:[%s257 + $0x1e0] sm:$0xff]
      %v394 = vld [vmem:[%s257 + $0x1e8] sm:$0xff]
      %v395 = vld [vmem:[%s257 + $0x1f0] sm:$0xff]
      %v396 = vld [vmem:[%s257 + $0x1f8] sm:$0xff]
      %v397 = vld [vmem:[%s236] sm:$0xf]
      %v398 = vld [vmem:[%s236 + $0x4] sm:$0xf]
      %v399 = vld [vmem:[%s236 + $0x8] sm:$0xf]
      %v400 = vld [vmem:[%s236 + $0xc] sm:$0xf]
      %v401 = vld [vmem:[%s236 + $0x10] sm:$0xf]
      %v402 = vld [vmem:[%s236 + $0x14] sm:$0xf]
      %v403 = vld [vmem:[%s236 + $0x18] sm:$0xf]
      %v404 = vld [vmem:[%s236 + $0x1c] sm:$0xf]
      %v405 = vld [vmem:[%s236 + $0x20] sm:$0xf]
      %v406 = vld [vmem:[%s236 + $0x24] sm:$0xf]
      %v407 = vld [vmem:[%s236 + $0x28] sm:$0xf]
      %v408 = vld [vmem:[%s236 + $0x2c] sm:$0xf]
      %v409 = vld [vmem:[%s236 + $0x30] sm:$0xf]
      %v410 = vld [vmem:[%s236 + $0x34] sm:$0xf]
      %v411 = vld [vmem:[%s236 + $0x38] sm:$0xf]
      %v412 = vld [vmem:[%s236 + $0x3c] sm:$0xf]
      %v413 = vld [vmem:[%s236 + $0x40] sm:$0xf]
      %v414 = vld [vmem:[%s236 + $0x44] sm:$0xf]
      %v415 = vld [vmem:[%s236 + $0x48] sm:$0xf]
      %v416 = vld [vmem:[%s236 + $0x4c] sm:$0xf]
      %v417 = vld [vmem:[%s236 + $0x50] sm:$0xf]
      %v418 = vld [vmem:[%s236 + $0x54] sm:$0xf]
      %v419 = vld [vmem:[%s236 + $0x58] sm:$0xf]
      %v420 = vld [vmem:[%s236 + $0x5c] sm:$0xf]
      %v421 = vld [vmem:[%s236 + $0x60] sm:$0xf]
      %v422 = vld [vmem:[%s236 + $0x64] sm:$0xf]
      %v423 = vld [vmem:[%s236 + $0x68] sm:$0xf]
      %v424 = vld [vmem:[%s236 + $0x6c] sm:$0xf]
      %v425 = vld [vmem:[%s236 + $0x70] sm:$0xf]
      %v426 = vld [vmem:[%s236 + $0x74] sm:$0xf]
      %v427 = vld [vmem:[%s236 + $0x78] sm:$0xf]
      %v428 = vld [vmem:[%s236 + $0x7c] sm:$0xf]
      %v429 = vld [vmem:[%s236 + $0x80] sm:$0xf]
      %v430 = vld [vmem:[%s236 + $0x84] sm:$0xf]
      %v431 = vld [vmem:[%s236 + $0x88] sm:$0xf]
      %v432 = vld [vmem:[%s236 + $0x8c] sm:$0xf]
      %v433 = vld [vmem:[%s236 + $0x90] sm:$0xf]
      %v434 = vld [vmem:[%s236 + $0x94] sm:$0xf]
      %v435 = vld [vmem:[%s236 + $0x98] sm:$0xf]
      %v436 = vld [vmem:[%s236 + $0x9c] sm:$0xf]
      %v437 = vld [vmem:[%s236 + $0xa0] sm:$0xf]
      %v438 = vld [vmem:[%s236 + $0xa4] sm:$0xf]
      %v439 = vld [vmem:[%s236 + $0xa8] sm:$0xf]
      %v440 = vld [vmem:[%s236 + $0xac] sm:$0xf]
      %v441 = vld [vmem:[%s236 + $0xb0] sm:$0xf]
      %v442 = vld [vmem:[%s236 + $0xb4] sm:$0xf]
      %v443 = vld [vmem:[%s236 + $0xb8] sm:$0xf]
      %v444 = vld [vmem:[%s236 + $0xbc] sm:$0xf]
      %v445 = vld [vmem:[%s236 + $0xc0] sm:$0xf]
      %v446 = vld [vmem:[%s236 + $0xc4] sm:$0xf]
      %v447 = vld [vmem:[%s236 + $0xc8] sm:$0xf]
      %v448 = vld [vmem:[%s236 + $0xcc] sm:$0xf]
      %v449 = vld [vmem:[%s236 + $0xd0] sm:$0xf]
      %v450 = vld [vmem:[%s236 + $0xd4] sm:$0xf]
      %v451 = vld [vmem:[%s236 + $0xd8] sm:$0xf]
      %v452 = vld [vmem:[%s236 + $0xdc] sm:$0xf]
      %v453 = vld [vmem:[%s236 + $0xe0] sm:$0xf]
      %v454 = vld [vmem:[%s236 + $0xe4] sm:$0xf]
      %v455 = vld [vmem:[%s236 + $0xe8] sm:$0xf]
      %v456 = vld [vmem:[%s236 + $0xec] sm:$0xf]
      %v457 = vld [vmem:[%s236 + $0xf0] sm:$0xf]
      %v458 = vld [vmem:[%s236 + $0xf4] sm:$0xf]
      %v459 = vld [vmem:[%s236 + $0xf8] sm:$0xf]
      %v460 = vld [vmem:[%s236 + $0xfc] sm:$0xf]
      %v461 = vld [vmem:[%s245] sm:$0xf]
      %v462 = vld [vmem:[%s245 + $0x4] sm:$0xf]
      %v463 = vld [vmem:[%s245 + $0x8] sm:$0xf]
      %v464 = vld [vmem:[%s245 + $0xc] sm:$0xf]
      %v529 = vunpack.c.l.b16 %v397
      %v530 = vunpack.c.l.b16 %v398
      %v531 = vunpack.c.l.b16 %v399
      %v532 = vunpack.c.l.b16 %v400
      %v533 = vunpack.c.l.b16 %v401
      %v534 = vunpack.c.l.b16 %v402
      %v535 = vunpack.c.l.b16 %v403
      %v536 = vunpack.c.l.b16 %v404
      %v537 = vunpack.c.l.b16 %v405
      %v538 = vunpack.c.l.b16 %v406
      %v539 = vunpack.c.l.b16 %v407
      %v540 = vunpack.c.l.b16 %v408
      %v541 = vunpack.c.l.b16 %v409
      %v542 = vunpack.c.l.b16 %v410
      %v543 = vunpack.c.l.b16 %v411
      %v544 = vunpack.c.l.b16 %v412
      %v545 = vunpack.c.l.b16 %v413
      %v546 = vunpack.c.l.b16 %v414
      %v547 = vunpack.c.l.b16 %v415
      %v548 = vunpack.c.l.b16 %v416
      %v549 = vunpack.c.l.b16 %v417
      %v550 = vunpack.c.l.b16 %v418
      %v551 = vunpack.c.l.b16 %v419
      %v552 = vunpack.c.l.b16 %v420
      %v553 = vunpack.c.l.b16 %v421
      %v554 = vunpack.c.l.b16 %v422
      %v555 = vunpack.c.l.b16 %v423
      %v556 = vunpack.c.l.b16 %v424
      %v557 = vunpack.c.l.b16 %v425
      %v558 = vunpack.c.l.b16 %v426
      %v559 = vunpack.c.l.b16 %v427
      %v560 = vunpack.c.l.b16 %v428
      %v561 = vunpack.c.l.b16 %v429
      %v562 = vunpack.c.l.b16 %v430
      %v563 = vunpack.c.l.b16 %v431
      %v564 = vunpack.c.l.b16 %v432
      %v565 = vunpack.c.l.b16 %v433
      %v566 = vunpack.c.l.b16 %v434
      %v567 = vunpack.c.l.b16 %v435
      %v568 = vunpack.c.l.b16 %v436
      %v569 = vunpack.c.l.b16 %v437
      %v570 = vunpack.c.l.b16 %v438
      %v571 = vunpack.c.l.b16 %v439
      %v572 = vunpack.c.l.b16 %v440
      %v573 = vunpack.c.l.b16 %v441
      %v574 = vunpack.c.l.b16 %v442
      %v575 = vunpack.c.l.b16 %v443
      %v576 = vunpack.c.l.b16 %v444
      %v577 = vunpack.c.l.b16 %v445
      %v578 = vunpack.c.l.b16 %v446
      %v579 = vunpack.c.l.b16 %v447
      %v580 = vunpack.c.l.b16 %v448
      %v581 = vunpack.c.l.b16 %v449
      %v582 = vunpack.c.l.b16 %v450
      %v583 = vunpack.c.l.b16 %v451
      %v584 = vunpack.c.l.b16 %v452
      %v585 = vunpack.c.l.b16 %v453
      %v586 = vunpack.c.l.b16 %v454
      %v587 = vunpack.c.l.b16 %v455
      %v588 = vunpack.c.l.b16 %v456
      %v589 = vunpack.c.l.b16 %v457
      %v590 = vunpack.c.l.b16 %v458
      %v591 = vunpack.c.l.b16 %v459
      %v592 = vunpack.c.l.b16 %v460
      %v593 = vpack.c.b16 %v530, %v529
      %v594 = vpack.c.b16 %v532, %v531
      %v595 = vpack.c.b16 %v534, %v533
      %v596 = vpack.c.b16 %v536, %v535
      %v597 = vpack.c.b16 %v538, %v537
      %v598 = vpack.c.b16 %v540, %v539
      %v599 = vpack.c.b16 %v542, %v541
      %v600 = vpack.c.b16 %v544, %v543
      %v601 = vpack.c.b16 %v546, %v545
      %v602 = vpack.c.b16 %v548, %v547
      %v603 = vpack.c.b16 %v550, %v549
      %v604 = vpack.c.b16 %v552, %v551
      %v605 = vpack.c.b16 %v554, %v553
      %v606 = vpack.c.b16 %v556, %v555
      %v607 = vpack.c.b16 %v558, %v557
      %v608 = vpack.c.b16 %v560, %v559
      %v609 = vpack.c.b16 %v562, %v561
      %v610 = vpack.c.b16 %v564, %v563
      %v611 = vpack.c.b16 %v566, %v565
      %v612 = vpack.c.b16 %v568, %v567
      %v613 = vpack.c.b16 %v570, %v569
      %v614 = vpack.c.b16 %v572, %v571
      %v615 = vpack.c.b16 %v574, %v573
      %v616 = vpack.c.b16 %v576, %v575
      %v617 = vpack.c.b16 %v578, %v577
      %v618 = vpack.c.b16 %v580, %v579
      %v619 = vpack.c.b16 %v582, %v581
      %v620 = vpack.c.b16 %v584, %v583
      %v621 = vpack.c.b16 %v586, %v585
      %v622 = vpack.c.b16 %v588, %v587
      %v623 = vpack.c.b16 %v590, %v589
      %v624 = vpack.c.b16 %v592, %v591
      %v629 = vunpack.c.l.b16 %v461
      %v630 = vunpack.c.l.b16 %v462
      %v631 = vunpack.c.l.b16 %v463
      %v632 = vunpack.c.l.b16 %v464
      %v633 = vpack.c.b16 %v630, %v629
      %v634 = vpack.c.b16 %v632, %v631
      %vm637 = vcmask 261120
      %v639 = vsel %vm637, %v593, 0
      %v642 = vsel %vm637, %v594, 0
      %v645 = vsel %vm637, %v595, 0
      %v648 = vsel %vm637, %v596, 0
      %v651 = vsel %vm637, %v597, 0
      %v654 = vsel %vm637, %v598, 0
      %v657 = vsel %vm637, %v599, 0
      %v660 = vsel %vm637, %v600, 0
      %v663 = vsel %vm637, %v601, 0
      %v666 = vsel %vm637, %v602, 0
      %v669 = vsel %vm637, %v603, 0
      %v672 = vsel %vm637, %v604, 0
      %v675 = vsel %vm637, %v605, 0
      %v678 = vsel %vm637, %v606, 0
      %v681 = vsel %vm637, %v607, 0
      %v684 = vsel %vm637, %v608, 0
      %v687 = vsel %vm637, %v609, 0
      %v690 = vsel %vm637, %v610, 0
      %v693 = vsel %vm637, %v611, 0
      %v696 = vsel %vm637, %v612, 0
      %v699 = vsel %vm637, %v613, 0
      %v702 = vsel %vm637, %v614, 0
      %v705 = vsel %vm637, %v615, 0
      %v708 = vsel %vm637, %v616, 0
      %v711 = vsel %vm637, %v617, 0
      %v714 = vsel %vm637, %v618, 0
      %v717 = vsel %vm637, %v619, 0
      %v720 = vsel %vm637, %v620, 0
      %v723 = vsel %vm637, %v621, 0
      %v726 = vsel %vm637, %v622, 0
      %v729 = vsel %vm637, %v623, 0
      %v732 = vsel %vm637, %v624, 0
      %734 = vmatpush.bf16.msra.mxu0 0
      %735 = vmatpush.bf16.msra.mxu0 0
      %736 = vmatpush.bf16.msra.mxu0 0
      %737 = vmatpush.bf16.msra.mxu0 0
      %738 = vmatpush.bf16.msra.mxu0 0
      %739 = vmatpush.bf16.msra.mxu0 0
      %740 = vmatpush.bf16.msra.mxu0 %v634
      %741 = vmatpush.bf16.msra.mxu0 %v633
      %742 = vmatmul.bf16.gmra.mxu0 %v639
      %v743 = vpop.f32.mrf.mxu0
      %v744 = vadd.f32 0.0, %v743
      %v745 = vpop.f32.mrf.mxu0
      %v746 = vadd.f32 0.0, %v745
      %747 = vmatmul.bf16.gmra.mxu0 %v642
      %v748 = vpop.f32.mrf.mxu0
      %v749 = vadd.f32 0.0, %v748
      %v750 = vpop.f32.mrf.mxu0
      %v751 = vadd.f32 0.0, %v750
      %752 = vmatmul.bf16.gmra.mxu0 %v645
      %v753 = vpop.f32.mrf.mxu0
      %v754 = vadd.f32 0.0, %v753
      %v755 = vpop.f32.mrf.mxu0
      %v756 = vadd.f32 0.0, %v755
      %757 = vmatmul.bf16.gmra.mxu0 %v648
      %v758 = vpop.f32.mrf.mxu0
      %v759 = vadd.f32 0.0, %v758
      %v760 = vpop.f32.mrf.mxu0
      %v761 = vadd.f32 0.0, %v760
      %762 = vmatmul.bf16.gmra.mxu0 %v651
      %v763 = vpop.f32.mrf.mxu0
      %v764 = vadd.f32 0.0, %v763
      %v765 = vpop.f32.mrf.mxu0
      %v766 = vadd.f32 0.0, %v765
      %767 = vmatmul.bf16.gmra.mxu0 %v654
      %v768 = vpop.f32.mrf.mxu0
      %v769 = vadd.f32 0.0, %v768
      %v770 = vpop.f32.mrf.mxu0
      %v771 = vadd.f32 0.0, %v770
      %772 = vmatmul.bf16.gmra.mxu0 %v657
      %v773 = vpop.f32.mrf.mxu0
      %v774 = vadd.f32 0.0, %v773
      %v775 = vpop.f32.mrf.mxu0
      %v776 = vadd.f32 0.0, %v775
      %777 = vmatmul.bf16.gmra.mxu0 %v660
      %v778 = vpop.f32.mrf.mxu0
      %v779 = vadd.f32 0.0, %v778
      %v780 = vpop.f32.mrf.mxu0
      %v781 = vadd.f32 0.0, %v780
      %782 = vmatmul.bf16.gmra.mxu0 %v663
      %v783 = vpop.f32.mrf.mxu0
      %v784 = vadd.f32 0.0, %v783
      %v785 = vpop.f32.mrf.mxu0
      %v786 = vadd.f32 0.0, %v785
      %787 = vmatmul.bf16.gmra.mxu0 %v666
      %v788 = vpop.f32.mrf.mxu0
      %v789 = vadd.f32 0.0, %v788
      %v790 = vpop.f32.mrf.mxu0
      %v791 = vadd.f32 0.0, %v790
      %792 = vmatmul.bf16.gmra.mxu0 %v669
      %v793 = vpop.f32.mrf.mxu0
      %v794 = vadd.f32 0.0, %v793
      %v795 = vpop.f32.mrf.mxu0
      %v796 = vadd.f32 0.0, %v795
      %797 = vmatmul.bf16.gmra.mxu0 %v672
      %v798 = vpop.f32.mrf.mxu0
      %v799 = vadd.f32 0.0, %v798
      %v800 = vpop.f32.mrf.mxu0
      %v801 = vadd.f32 0.0, %v800
      %802 = vmatmul.bf16.gmra.mxu0 %v675
      %v803 = vpop.f32.mrf.mxu0
      %v804 = vadd.f32 0.0, %v803
      %v805 = vpop.f32.mrf.mxu0
      %v806 = vadd.f32 0.0, %v805
      %807 = vmatmul.bf16.gmra.mxu0 %v678
      %v808 = vpop.f32.mrf.mxu0
      %v809 = vadd.f32 0.0, %v808
      %v810 = vpop.f32.mrf.mxu0
      %v811 = vadd.f32 0.0, %v810
      %812 = vmatmul.bf16.gmra.mxu0 %v681
      %v813 = vpop.f32.mrf.mxu0
      %v814 = vadd.f32 0.0, %v813
      %v815 = vpop.f32.mrf.mxu0
      %v816 = vadd.f32 0.0, %v815
      %817 = vmatmul.bf16.gmra.mxu0 %v684
      %v818 = vpop.f32.mrf.mxu0
      %v819 = vadd.f32 0.0, %v818
      %v820 = vpop.f32.mrf.mxu0
      %v821 = vadd.f32 0.0, %v820
      %822 = vmatmul.bf16.gmra.mxu0 %v687
      %v823 = vpop.f32.mrf.mxu0
      %v824 = vadd.f32 0.0, %v823
      %v825 = vpop.f32.mrf.mxu0
      %v826 = vadd.f32 0.0, %v825
      %827 = vmatmul.bf16.gmra.mxu0 %v690
      %v828 = vpop.f32.mrf.mxu0
      %v829 = vadd.f32 0.0, %v828
      %v830 = vpop.f32.mrf.mxu0
      %v831 = vadd.f32 0.0, %v830
      %832 = vmatmul.bf16.gmra.mxu0 %v693
      %v833 = vpop.f32.mrf.mxu0
      %v834 = vadd.f32 0.0, %v833
      %v835 = vpop.f32.mrf.mxu0
      %v836 = vadd.f32 0.0, %v835
      %837 = vmatmul.bf16.gmra.mxu0 %v696
      %v838 = vpop.f32.mrf.mxu0
      %v839 = vadd.f32 0.0, %v838
      %v840 = vpop.f32.mrf.mxu0
      %v841 = vadd.f32 0.0, %v840
      %842 = vmatmul.bf16.gmra.mxu0 %v699
      %v843 = vpop.f32.mrf.mxu0
      %v844 = vadd.f32 0.0, %v843
      %v845 = vpop.f32.mrf.mxu0
      %v846 = vadd.f32 0.0, %v845
      %847 = vmatmul.bf16.gmra.mxu0 %v702
      %v848 = vpop.f32.mrf.mxu0
      %v849 = vadd.f32 0.0, %v848
      %v850 = vpop.f32.mrf.mxu0
      %v851 = vadd.f32 0.0, %v850
      %852 = vmatmul.bf16.gmra.mxu0 %v705
      %v853 = vpop.f32.mrf.mxu0
      %v854 = vadd.f32 0.0, %v853
      %v855 = vpop.f32.mrf.mxu0
      %v856 = vadd.f32 0.0, %v855
      %857 = vmatmul.bf16.gmra.mxu0 %v708
      %v858 = vpop.f32.mrf.mxu0
      %v859 = vadd.f32 0.0, %v858
      %v860 = vpop.f32.mrf.mxu0
      %v861 = vadd.f32 0.0, %v860
      %862 = vmatmul.bf16.gmra.mxu0 %v711
      %v863 = vpop.f32.mrf.mxu0
      %v864 = vadd.f32 0.0, %v863
      %v865 = vpop.f32.mrf.mxu0
      %v866 = vadd.f32 0.0, %v865
      %867 = vmatmul.bf16.gmra.mxu0 %v714
      %v868 = vpop.f32.mrf.mxu0
      %v869 = vadd.f32 0.0, %v868
      %v870 = vpop.f32.mrf.mxu0
      %v871 = vadd.f32 0.0, %v870
      %872 = vmatmul.bf16.gmra.mxu0 %v717
      %v873 = vpop.f32.mrf.mxu0
      %v874 = vadd.f32 0.0, %v873
      %v875 = vpop.f32.mrf.mxu0
      %v876 = vadd.f32 0.0, %v875
      %877 = vmatmul.bf16.gmra.mxu0 %v720
      %v878 = vpop.f32.mrf.mxu0
      %v879 = vadd.f32 0.0, %v878
      %v880 = vpop.f32.mrf.mxu0
      %v881 = vadd.f32 0.0, %v880
      %882 = vmatmul.bf16.gmra.mxu0 %v723
      %v883 = vpop.f32.mrf.mxu0
      %v884 = vadd.f32 0.0, %v883
      %v885 = vpop.f32.mrf.mxu0
      %v886 = vadd.f32 0.0, %v885
      %887 = vmatmul.bf16.gmra.mxu0 %v726
      %v888 = vpop.f32.mrf.mxu0
      %v889 = vadd.f32 0.0, %v888
      %v890 = vpop.f32.mrf.mxu0
      %v891 = vadd.f32 0.0, %v890
      %892 = vmatmul.bf16.gmra.mxu0 %v729
      %v893 = vpop.f32.mrf.mxu0
      %v894 = vadd.f32 0.0, %v893
      %v895 = vpop.f32.mrf.mxu0
      %v896 = vadd.f32 0.0, %v895
      %897 = vmatmul.bf16.gmra.mxu0 %v732
      %v898 = vpop.f32.mrf.mxu0
      %v899 = vadd.f32 0.0, %v898
      %v900 = vpop.f32.mrf.mxu0
      %v901 = vadd.f32 0.0, %v900
      %902 = vdwg.mxu0
      %v903 = vadd.f32 %v333, %v744
      %v904 = vadd.f32 %v334, %v746
      %v905 = vadd.f32 %v335, %v749
      %v906 = vadd.f32 %v336, %v751
      %v907 = vadd.f32 %v337, %v754
      %v908 = vadd.f32 %v338, %v756
      %v909 = vadd.f32 %v339, %v759
      %v910 = vadd.f32 %v340, %v761
      %v911 = vadd.f32 %v341, %v764
      %v912 = vadd.f32 %v342, %v766
      %v913 = vadd.f32 %v343, %v769
      %v914 = vadd.f32 %v344, %v771
      %v915 = vadd.f32 %v345, %v774
      %v916 = vadd.f32 %v346, %v776
      %v917 = vadd.f32 %v347, %v779
      %v918 = vadd.f32 %v348, %v781
      %v919 = vadd.f32 %v349, %v784
      %v920 = vadd.f32 %v350, %v786
      %v921 = vadd.f32 %v351, %v789
      %v922 = vadd.f32 %v352, %v791
      %v923 = vadd.f32 %v353, %v794
      %v924 = vadd.f32 %v354, %v796
      %v925 = vadd.f32 %v355, %v799
      %v926 = vadd.f32 %v356, %v801
      %v927 = vadd.f32 %v357, %v804
      %v928 = vadd.f32 %v358, %v806
      %v929 = vadd.f32 %v359, %v809
      %v930 = vadd.f32 %v360, %v811
      %v931 = vadd.f32 %v361, %v814
      %v932 = vadd.f32 %v362, %v816
      %v933 = vadd.f32 %v363, %v819
      %v934 = vadd.f32 %v364, %v821
      %v935 = vadd.f32 %v365, %v824
      %v936 = vadd.f32 %v366, %v826
      %v937 = vadd.f32 %v367, %v829
      %v938 = vadd.f32 %v368, %v831
      %v939 = vadd.f32 %v369, %v834
      %v940 = vadd.f32 %v370, %v836
      %v941 = vadd.f32 %v371, %v839
      %v942 = vadd.f32 %v372, %v841
      %v943 = vadd.f32 %v373, %v844
      %v944 = vadd.f32 %v374, %v846
      %v945 = vadd.f32 %v375, %v849
      %v946 = vadd.f32 %v376, %v851
      %v947 = vadd.f32 %v377, %v854
      %v948 = vadd.f32 %v378, %v856
      %v949 = vadd.f32 %v379, %v859
      %v950 = vadd.f32 %v380, %v861
      %v951 = vadd.f32 %v381, %v864
      %v952 = vadd.f32 %v382, %v866
      %v953 = vadd.f32 %v383, %v869
      %v954 = vadd.f32 %v384, %v871
      %v955 = vadd.f32 %v385, %v874
      %v956 = vadd.f32 %v386, %v876
      %v957 = vadd.f32 %v387, %v879
      %v958 = vadd.f32 %v388, %v881
      %v959 = vadd.f32 %v389, %v884
      %v960 = vadd.f32 %v390, %v886
      %v961 = vadd.f32 %v391, %v889
      %v962 = vadd.f32 %v392, %v891
      %v963 = vadd.f32 %v393, %v894
      %v964 = vadd.f32 %v394, %v896
      %v965 = vadd.f32 %v395, %v899
      %v966 = vadd.f32 %v396, %v901
      %vm967 = vcmask 523264
      %968 = vst.msk [vmem:[%s257] sm:$0xff] %vm967, %v903
      %969 = vst.msk [vmem:[%s257 + $0x8] sm:$0xff] %vm967, %v904
      %970 = vst.msk [vmem:[%s257 + $0x10] sm:$0xff] %vm967, %v905
      %971 = vst.msk [vmem:[%s257 + $0x18] sm:$0xff] %vm967, %v906
      %972 = vst.msk [vmem:[%s257 + $0x20] sm:$0xff] %vm967, %v907
      %973 = vst.msk [vmem:[%s257 + $0x28] sm:$0xff] %vm967, %v908
      %974 = vst.msk [vmem:[%s257 + $0x30] sm:$0xff] %vm967, %v909
      %975 = vst.msk [vmem:[%s257 + $0x38] sm:$0xff] %vm967, %v910
      %976 = vst.msk [vmem:[%s257 + $0x40] sm:$0xff] %vm967, %v911
      %977 = vst.msk [vmem:[%s257 + $0x48] sm:$0xff] %vm967, %v912
      %978 = vst.msk [vmem:[%s257 + $0x50] sm:$0xff] %vm967, %v913
      %979 = vst.msk [vmem:[%s257 + $0x58] sm:$0xff] %vm967, %v914
      %980 = vst.msk [vmem:[%s257 + $0x60] sm:$0xff] %vm967, %v915
      %981 = vst.msk [vmem:[%s257 + $0x68] sm:$0xff] %vm967, %v916
      %982 = vst.msk [vmem:[%s257 + $0x70] sm:$0xff] %vm967, %v917
      %983 = vst.msk [vmem:[%s257 + $0x78] sm:$0xff] %vm967, %v918
      %984 = vst.msk [vmem:[%s257 + $0x80] sm:$0xff] %vm967, %v919
      %985 = vst.msk [vmem:[%s257 + $0x88] sm:$0xff] %vm967, %v920
      %986 = vst.msk [vmem:[%s257 + $0x90] sm:$0xff] %vm967, %v921
      %987 = vst.msk [vmem:[%s257 + $0x98] sm:$0xff] %vm967, %v922
      %988 = vst.msk [vmem:[%s257 + $0xa0] sm:$0xff] %vm967, %v923
      %989 = vst.msk [vmem:[%s257 + $0xa8] sm:$0xff] %vm967, %v924
      %990 = vst.msk [vmem:[%s257 + $0xb0] sm:$0xff] %vm967, %v925
      %991 = vst.msk [vmem:[%s257 + $0xb8] sm:$0xff] %vm967, %v926
      %992 = vst.msk [vmem:[%s257 + $0xc0] sm:$0xff] %vm967, %v927
      %993 = vst.msk [vmem:[%s257 + $0xc8] sm:$0xff] %vm967, %v928
      %994 = vst.msk [vmem:[%s257 + $0xd0] sm:$0xff] %vm967, %v929
      %995 = vst.msk [vmem:[%s257 + $0xd8] sm:$0xff] %vm967, %v930
      %996 = vst.msk [vmem:[%s257 + $0xe0] sm:$0xff] %vm967, %v931
      %997 = vst.msk [vmem:[%s257 + $0xe8] sm:$0xff] %vm967, %v932
      %998 = vst.msk [vmem:[%s257 + $0xf0] sm:$0xff] %vm967, %v933
      %999 = vst.msk [vmem:[%s257 + $0xf8] sm:$0xff] %vm967, %v934
      %1000 = vst.msk [vmem:[%s257 + $0x100] sm:$0xff] %vm967, %v935
      %1001 = vst.msk [vmem:[%s257 + $0x108] sm:$0xff] %vm967, %v936
      %1002 = vst.msk [vmem:[%s257 + $0x110] sm:$0xff] %vm967, %v937
      %1003 = vst.msk [vmem:[%s257 + $0x118] sm:$0xff] %vm967, %v938
      %1004 = vst.msk [vmem:[%s257 + $0x120] sm:$0xff] %vm967, %v939
      %1005 = vst.msk [vmem:[%s257 + $0x128] sm:$0xff] %vm967, %v940
      %1006 = vst.msk [vmem:[%s257 + $0x130] sm:$0xff] %vm967, %v941
      %1007 = vst.msk [vmem:[%s257 + $0x138] sm:$0xff] %vm967, %v942
      %1008 = vst.msk [vmem:[%s257 + $0x140] sm:$0xff] %vm967, %v943
      %1009 = vst.msk [vmem:[%s257 + $0x148] sm:$0xff] %vm967, %v944
      %1010 = vst.msk [vmem:[%s257 + $0x150] sm:$0xff] %vm967, %v945
      %1011 = vst.msk [vmem:[%s257 + $0x158] sm:$0xff] %vm967, %v946
      %1012 = vst.msk [vmem:[%s257 + $0x160] sm:$0xff] %vm967, %v947
      %1013 = vst.msk [vmem:[%s257 + $0x168] sm:$0xff] %vm967, %v948
      %1014 = vst.msk [vmem:[%s257 + $0x170] sm:$0xff] %vm967, %v949
      %1015 = vst.msk [vmem:[%s257 + $0x178] sm:$0xff] %vm967, %v950
      %1016 = vst.msk [vmem:[%s257 + $0x180] sm:$0xff] %vm967, %v951
      %1017 = vst.msk [vmem:[%s257 + $0x188] sm:$0xff] %vm967, %v952
      %1018 = vst.msk [vmem:[%s257 + $0x190] sm:$0xff] %vm967, %v953
      %1019 = vst.msk [vmem:[%s257 + $0x198] sm:$0xff] %vm967, %v954
      %1020 = vst.msk [vmem:[%s257 + $0x1a0] sm:$0xff] %vm967, %v955
      %1021 = vst.msk [vmem:[%s257 + $0x1a8] sm:$0xff] %vm967, %v956
      %1022 = vst.msk [vmem:[%s257 + $0x1b0] sm:$0xff] %vm967, %v957
      %1023 = vst.msk [vmem:[%s257 + $0x1b8] sm:$0xff] %vm967, %v958
      %1024 = vst.msk [vmem:[%s257 + $0x1c0] sm:$0xff] %vm967, %v959
      %1025 = vst.msk [vmem:[%s257 + $0x1c8] sm:$0xff] %vm967, %v960
      %1026 = vst.msk [vmem:[%s257 + $0x1d0] sm:$0xff] %vm967, %v961
      %1027 = vst.msk [vmem:[%s257 + $0x1d8] sm:$0xff] %vm967, %v962
      %1028 = vst.msk [vmem:[%s257 + $0x1e0] sm:$0xff] %vm967, %v963
      %1029 = vst.msk [vmem:[%s257 + $0x1e8] sm:$0xff] %vm967, %v964
      %1030 = vst.msk [vmem:[%s257 + $0x1f0] sm:$0xff] %vm967, %v965
      %1031 = vst.msk [vmem:[%s257 + $0x1f8] sm:$0xff] %vm967, %v966
      // Predicated region
      $region37: #{tpu_custom_call.1} parent=31 // pred_check
        %p1032 = pneg %p260
      $region38: #{tpu_custom_call.1} parent=31 // pred_check_branch
        %1034 = sbr.rel (%p1032) target = $region40
      $region39: #{tpu_custom_call.1} parent=31 // pred_region
        %v1035 = vld [vmem:[%s257] sm:$0xff]
        %v1036 = vld [vmem:[%s257 + $0x8] sm:$0xff]
        %v1037 = vld [vmem:[%s257 + $0x10] sm:$0xff]
        %v1038 = vld [vmem:[%s257 + $0x18] sm:$0xff]
        %v1039 = vld [vmem:[%s257 + $0x20] sm:$0xff]
        %v1040 = vld [vmem:[%s257 + $0x28] sm:$0xff]
        %v1041 = vld [vmem:[%s257 + $0x30] sm:$0xff]
        %v1042 = vld [vmem:[%s257 + $0x38] sm:$0xff]
        %v1043 = vld [vmem:[%s257 + $0x40] sm:$0xff]
        %v1044 = vld [vmem:[%s257 + $0x48] sm:$0xff]
        %v1045 = vld [vmem:[%s257 + $0x50] sm:$0xff]
        %v1046 = vld [vmem:[%s257 + $0x58] sm:$0xff]
        %v1047 = vld [vmem:[%s257 + $0x60] sm:$0xff]
        %v1048 = vld [vmem:[%s257 + $0x68] sm:$0xff]
        %v1049 = vld [vmem:[%s257 + $0x70] sm:$0xff]
        %v1050 = vld [vmem:[%s257 + $0x78] sm:$0xff]
        %v1051 = vld [vmem:[%s257 + $0x80] sm:$0xff]
        %v1052 = vld [vmem:[%s257 + $0x88] sm:$0xff]
        %v1053 = vld [vmem:[%s257 + $0x90] sm:$0xff]
        %v1054 = vld [vmem:[%s257 + $0x98] sm:$0xff]
        %v1055 = vld [vmem:[%s257 + $0xa0] sm:$0xff]
        %v1056 = vld [vmem:[%s257 + $0xa8] sm:$0xff]
        %v1057 = vld [vmem:[%s257 + $0xb0] sm:$0xff]
        %v1058 = vld [vmem:[%s257 + $0xb8] sm:$0xff]
        %v1059 = vld [vmem:[%s257 + $0xc0] sm:$0xff]
        %v1060 = vld [vmem:[%s257 + $0xc8] sm:$0xff]
        %v1061 = vld [vmem:[%s257 + $0xd0] sm:$0xff]
        %v1062 = vld [vmem:[%s257 + $0xd8] sm:$0xff]
        %v1063 = vld [vmem:[%s257 + $0xe0] sm:$0xff]
        %v1064 = vld [vmem:[%s257 + $0xe8] sm:$0xff]
        %v1065 = vld [vmem:[%s257 + $0xf0] sm:$0xff]
        %v1066 = vld [vmem:[%s257 + $0xf8] sm:$0xff]
        %v1067 = vld [vmem:[%s257 + $0x100] sm:$0xff]
        %v1068 = vld [vmem:[%s257 + $0x108] sm:$0xff]
        %v1069 = vld [vmem:[%s257 + $0x110] sm:$0xff]
        %v1070 = vld [vmem:[%s257 + $0x118] sm:$0xff]
        %v1071 = vld [vmem:[%s257 + $0x120] sm:$0xff]
        %v1072 = vld [vmem:[%s257 + $0x128] sm:$0xff]
        %v1073 = vld [vmem:[%s257 + $0x130] sm:$0xff]
        %v1074 = vld [vmem:[%s257 + $0x138] sm:$0xff]
        %v1075 = vld [vmem:[%s257 + $0x140] sm:$0xff]
        %v1076 = vld [vmem:[%s257 + $0x148] sm:$0xff]
        %v1077 = vld [vmem:[%s257 + $0x150] sm:$0xff]
        %v1078 = vld [vmem:[%s257 + $0x158] sm:$0xff]
        %v1079 = vld [vmem:[%s257 + $0x160] sm:$0xff]
        %v1080 = vld [vmem:[%s257 + $0x168] sm:$0xff]
        %v1081 = vld [vmem:[%s257 + $0x170] sm:$0xff]
        %v1082 = vld [vmem:[%s257 + $0x178] sm:$0xff]
        %v1083 = vld [vmem:[%s257 + $0x180] sm:$0xff]
        %v1084 = vld [vmem:[%s257 + $0x188] sm:$0xff]
        %v1085 = vld [vmem:[%s257 + $0x190] sm:$0xff]
        %v1086 = vld [vmem:[%s257 + $0x198] sm:$0xff]
        %v1087 = vld [vmem:[%s257 + $0x1a0] sm:$0xff]
        %v1088 = vld [vmem:[%s257 + $0x1a8] sm:$0xff]
        %v1089 = vld [vmem:[%s257 + $0x1b0] sm:$0xff]
        %v1090 = vld [vmem:[%s257 + $0x1b8] sm:$0xff]
        %v1091 = vld [vmem:[%s257 + $0x1c0] sm:$0xff]
        %v1092 = vld [vmem:[%s257 + $0x1c8] sm:$0xff]
        %v1093 = vld [vmem:[%s257 + $0x1d0] sm:$0xff]
        %v1094 = vld [vmem:[%s257 + $0x1d8] sm:$0xff]
        %v1095 = vld [vmem:[%s257 + $0x1e0] sm:$0xff]
        %v1096 = vld [vmem:[%s257 + $0x1e8] sm:$0xff]
        %v1097 = vld [vmem:[%s257 + $0x1f0] sm:$0xff]
        %v1098 = vld [vmem:[%s257 + $0x1f8] sm:$0xff]
        %v1099 = vmax.f32 %v1035, 0.0
        %v1100 = vmax.f32 %v1036, 0.0
        %v1101 = vmax.f32 %v1037, 0.0
        %v1102 = vmax.f32 %v1038, 0.0
        %v1103 = vmax.f32 %v1039, 0.0
        %v1104 = vmax.f32 %v1040, 0.0
        %v1105 = vmax.f32 %v1041, 0.0
        %v1106 = vmax.f32 %v1042, 0.0
        %v1107 = vmax.f32 %v1043, 0.0
        %v1108 = vmax.f32 %v1044, 0.0
        %v1109 = vmax.f32 %v1045, 0.0
        %v1110 = vmax.f32 %v1046, 0.0
        %v1111 = vmax.f32 %v1047, 0.0
        %v1112 = vmax.f32 %v1048, 0.0
        %v1113 = vmax.f32 %v1049, 0.0
        %v1114 = vmax.f32 %v1050, 0.0
        %v1115 = vmax.f32 %v1051, 0.0
        %v1116 = vmax.f32 %v1052, 0.0
        %v1117 = vmax.f32 %v1053, 0.0
        %v1118 = vmax.f32 %v1054, 0.0
        %v1119 = vmax.f32 %v1055, 0.0
        %v1120 = vmax.f32 %v1056, 0.0
        %v1121 = vmax.f32 %v1057, 0.0
        %v1122 = vmax.f32 %v1058, 0.0
        %v1123 = vmax.f32 %v1059, 0.0
        %v1124 = vmax.f32 %v1060, 0.0
        %v1125 = vmax.f32 %v1061, 0.0
        %v1126 = vmax.f32 %v1062, 0.0
        %v1127 = vmax.f32 %v1063, 0.0
        %v1128 = vmax.f32 %v1064, 0.0
        %v1129 = vmax.f32 %v1065, 0.0
        %v1130 = vmax.f32 %v1066, 0.0
        %v1131 = vmax.f32 %v1067, 0.0
        %v1132 = vmax.f32 %v1068, 0.0
        %v1133 = vmax.f32 %v1069, 0.0
        %v1134 = vmax.f32 %v1070, 0.0
        %v1135 = vmax.f32 %v1071, 0.0
        %v1136 = vmax.f32 %v1072, 0.0
        %v1137 = vmax.f32 %v1073, 0.0
        %v1138 = vmax.f32 %v1074, 0.0
        %v1139 = vmax.f32 %v1075, 0.0
        %v1140 = vmax.f32 %v1076, 0.0
        %v1141 = vmax.f32 %v1077, 0.0
        %v1142 = vmax.f32 %v1078, 0.0
        %v1143 = vmax.f32 %v1079, 0.0
        %v1144 = vmax.f32 %v1080, 0.0
        %v1145 = vmax.f32 %v1081, 0.0
        %v1146 = vmax.f32 %v1082, 0.0
        %v1147 = vmax.f32 %v1083, 0.0
        %v1148 = vmax.f32 %v1084, 0.0
        %v1149 = vmax.f32 %v1085, 0.0
        %v1150 = vmax.f32 %v1086, 0.0
        %v1151 = vmax.f32 %v1087, 0.0
        %v1152 = vmax.f32 %v1088, 0.0
        %v1153 = vmax.f32 %v1089, 0.0
        %v1154 = vmax.f32 %v1090, 0.0
        %v1155 = vmax.f32 %v1091, 0.0
        %v1156 = vmax.f32 %v1092, 0.0
        %v1157 = vmax.f32 %v1093, 0.0
        %v1158 = vmax.f32 %v1094, 0.0
        %v1159 = vmax.f32 %v1095, 0.0
        %v1160 = vmax.f32 %v1096, 0.0
        %v1161 = vmax.f32 %v1097, 0.0
        %v1162 = vmax.f32 %v1098, 0.0
        %1163 = vst.msk [vmem:[%s257] sm:$0xff] %vm967, %v1099
        %1164 = vst.msk [vmem:[%s257 + $0x8] sm:$0xff] %vm967, %v1100
        %1165 = vst.msk [vmem:[%s257 + $0x10] sm:$0xff] %vm967, %v1101
        %1166 = vst.msk [vmem:[%s257 + $0x18] sm:$0xff] %vm967, %v1102
        %1167 = vst.msk [vmem:[%s257 + $0x20] sm:$0xff] %vm967, %v1103
        %1168 = vst.msk [vmem:[%s257 + $0x28] sm:$0xff] %vm967, %v1104
        %1169 = vst.msk [vmem:[%s257 + $0x30] sm:$0xff] %vm967, %v1105
        %1170 = vst.msk [vmem:[%s257 + $0x38] sm:$0xff] %vm967, %v1106
        %1171 = vst.msk [vmem:[%s257 + $0x40] sm:$0xff] %vm967, %v1107
        %1172 = vst.msk [vmem:[%s257 + $0x48] sm:$0xff] %vm967, %v1108
        %1173 = vst.msk [vmem:[%s257 + $0x50] sm:$0xff] %vm967, %v1109
        %1174 = vst.msk [vmem:[%s257 + $0x58] sm:$0xff] %vm967, %v1110
        %1175 = vst.msk [vmem:[%s257 + $0x60] sm:$0xff] %vm967, %v1111
        %1176 = vst.msk [vmem:[%s257 + $0x68] sm:$0xff] %vm967, %v1112
        %1177 = vst.msk [vmem:[%s257 + $0x70] sm:$0xff] %vm967, %v1113
        %1178 = vst.msk [vmem:[%s257 + $0x78] sm:$0xff] %vm967, %v1114
        %1179 = vst.msk [vmem:[%s257 + $0x80] sm:$0xff] %vm967, %v1115
        %1180 = vst.msk [vmem:[%s257 + $0x88] sm:$0xff] %vm967, %v1116
        %1181 = vst.msk [vmem:[%s257 + $0x90] sm:$0xff] %vm967, %v1117
        %1182 = vst.msk [vmem:[%s257 + $0x98] sm:$0xff] %vm967, %v1118
        %1183 = vst.msk [vmem:[%s257 + $0xa0] sm:$0xff] %vm967, %v1119
        %1184 = vst.msk [vmem:[%s257 + $0xa8] sm:$0xff] %vm967, %v1120
        %1185 = vst.msk [vmem:[%s257 + $0xb0] sm:$0xff] %vm967, %v1121
        %1186 = vst.msk [vmem:[%s257 + $0xb8] sm:$0xff] %vm967, %v1122
        %1187 = vst.msk [vmem:[%s257 + $0xc0] sm:$0xff] %vm967, %v1123
        %1188 = vst.msk [vmem:[%s257 + $0xc8] sm:$0xff] %vm967, %v1124
        %1189 = vst.msk [vmem:[%s257 + $0xd0] sm:$0xff] %vm967, %v1125
        %1190 = vst.msk [vmem:[%s257 + $0xd8] sm:$0xff] %vm967, %v1126
        %1191 = vst.msk [vmem:[%s257 + $0xe0] sm:$0xff] %vm967, %v1127
        %1192 = vst.msk [vmem:[%s257 + $0xe8] sm:$0xff] %vm967, %v1128
        %1193 = vst.msk [vmem:[%s257 + $0xf0] sm:$0xff] %vm967, %v1129
        %1194 = vst.msk [vmem:[%s257 + $0xf8] sm:$0xff] %vm967, %v1130
        %1195 = vst.msk [vmem:[%s257 + $0x100] sm:$0xff] %vm967, %v1131
        %1196 = vst.msk [vmem:[%s257 + $0x108] sm:$0xff] %vm967, %v1132
        %1197 = vst.msk [vmem:[%s257 + $0x110] sm:$0xff] %vm967, %v1133
        %1198 = vst.msk [vmem:[%s257 + $0x118] sm:$0xff] %vm967, %v1134
        %1199 = vst.msk [vmem:[%s257 + $0x120] sm:$0xff] %vm967, %v1135
        %1200 = vst.msk [vmem:[%s257 + $0x128] sm:$0xff] %vm967, %v1136
        %1201 = vst.msk [vmem:[%s257 + $0x130] sm:$0xff] %vm967, %v1137
        %1202 = vst.msk [vmem:[%s257 + $0x138] sm:$0xff] %vm967, %v1138
        %1203 = vst.msk [vmem:[%s257 + $0x140] sm:$0xff] %vm967, %v1139
        %1204 = vst.msk [vmem:[%s257 + $0x148] sm:$0xff] %vm967, %v1140
        %1205 = vst.msk [vmem:[%s257 + $0x150] sm:$0xff] %vm967, %v1141
        %1206 = vst.msk [vmem:[%s257 + $0x158] sm:$0xff] %vm967, %v1142
        %1207 = vst.msk [vmem:[%s257 + $0x160] sm:$0xff] %vm967, %v1143
        %1208 = vst.msk [vmem:[%s257 + $0x168] sm:$0xff] %vm967, %v1144
        %1209 = vst.msk [vmem:[%s257 + $0x170] sm:$0xff] %vm967, %v1145
        %1210 = vst.msk [vmem:[%s257 + $0x178] sm:$0xff] %vm967, %v1146
        %1211 = vst.msk [vmem:[%s257 + $0x180] sm:$0xff] %vm967, %v1147
        %1212 = vst.msk [vmem:[%s257 + $0x188] sm:$0xff] %vm967, %v1148
        %1213 = vst.msk [vmem:[%s257 + $0x190] sm:$0xff] %vm967, %v1149
        %1214 = vst.msk [vmem:[%s257 + $0x198] sm:$0xff] %vm967, %v1150
        %1215 = vst.msk [vmem:[%s257 + $0x1a0] sm:$0xff] %vm967, %v1151
        %1216 = vst.msk [vmem:[%s257 + $0x1a8] sm:$0xff] %vm967, %v1152
        %1217 = vst.msk [vmem:[%s257 + $0x1b0] sm:$0xff] %vm967, %v1153
        %1218 = vst.msk [vmem:[%s257 + $0x1b8] sm:$0xff] %vm967, %v1154
        %1219 = vst.msk [vmem:[%s257 + $0x1c0] sm:$0xff] %vm967, %v1155
        %1220 = vst.msk [vmem:[%s257 + $0x1c8] sm:$0xff] %vm967, %v1156
        %1221 = vst.msk [vmem:[%s257 + $0x1d0] sm:$0xff] %vm967, %v1157
        %1222 = vst.msk [vmem:[%s257 + $0x1d8] sm:$0xff] %vm967, %v1158
        %1223 = vst.msk [vmem:[%s257 + $0x1e0] sm:$0xff] %vm967, %v1159
        %1224 = vst.msk [vmem:[%s257 + $0x1e8] sm:$0xff] %vm967, %v1160
        %1225 = vst.msk [vmem:[%s257 + $0x1f0] sm:$0xff] %vm967, %v1161
        %1226 = vst.msk [vmem:[%s257 + $0x1f8] sm:$0xff] %vm967, %v1162
      $region40: #{tpu_custom_call.1} parent=31 // pred_fallthru
        _
      %s1227 = smul.u32 64, %s19
      %p1228 = scmp.lt.s32.totalorder %s1227, 5759
      %s1229 = scalar_select %p1228, %s1227, 5759
      %p1230 = scmp.lt.s32.totalorder %s20, 0
      %s1231 = scalar_select %p1230, %s20, 0
      %s1232 = sadd.s32 %s1231, %s1229
      %s1233 = smul.addr %s1232, 8
      %s1234 = scalar_lea.vmem %s3, %s1233
      // Predicated region
      $region41: #{tpu_custom_call.1} parent=31 // pred_check
        %p1235 = pneg %p135
      $region42: #{tpu_custom_call.1} parent=31 // pred_check_branch
        %1237 = sbr.rel (%p1235) target = $region44
      $region43: #{tpu_custom_call.1} parent=31 // pred_region
        %s1238 = smul.u32 64, %s19
      $region44: #{tpu_custom_call.1} parent=31 // pred_fallthru
        _
    $region32: #{tpu_custom_call.1} parent=5 // pred_fallthru
      _
    %p1239 = scmp.le.s32.totalorder 2, %s9
    // Predicated region
    $region45: #{tpu_custom_call.1} parent=5 // pred_check
      %p1240 = pneg %p1239
    $region46: #{tpu_custom_call.1} parent=5 // pred_check_branch
      %1242 = sbr.rel (%p1240) target = $region48
    $region47: #{tpu_custom_call.1} parent=5 // pred_region
      %s1243 = ssub.s32 %s9, 2
      // Predicated region
      $region49: #{tpu_custom_call.1} parent=47 // pred_check
        %p1244 = pneg %p141
      $region50: #{tpu_custom_call.1} parent=47 // pred_check_branch
        %1246 = sbr.rel (%p1244) target = $region52
      $region51: #{tpu_custom_call.1} parent=47 // pred_region
        %s1247 = smul.u32 64, %s22
        %p1248 = scmp.lt.s32.totalorder %s1247, 5759
        %s1249 = scalar_select %p1248, %s1247, 5759
        %p1250 = scmp.lt.s32.totalorder %s23, 0
        %s1251 = scalar_select %p1250, %s23, 0
        %s1252 = sadd.s32 %s1251, %s1249
        %s1253 = smul.addr %s1252, 8
        %s1254 = scalar_lea.vmem %s3, %s1253
      $region52: #{tpu_custom_call.1} parent=47 // pred_fallthru
        _
    $region48: #{tpu_custom_call.1} parent=5 // pred_fallthru
      _
  $region6: #{tpu_custom_call.1} parent=0 // loop_footer
    %s13 = sadd.s32 1, %s9
  $region7: #{tpu_custom_call.1} parent=0 // loop_footer_branch
    %8 = sbr.rel target = $region3
  $region8: #{tpu_custom_call.1} parent=0 // loop_exit
    _

</llo_original>
